<compile_context>
chip_gen: v7x
topology: tpu7x:2x2x1
jax: 0.10.0
libtpu: 0.0.40
codegen_flags: <defaults>
</compile_context>

<pallas_src>
import math

import jax
import jax.numpy as jnp
from jax.experimental import pallas as pl
from jax.experimental.pallas import tpu as pltpu


_INV_SQRT2 = 0.7071067811865476
_SQRT_2_OVER_PI = 0.7978845608028654


def _round_up(x, m):
    return ((x + m - 1) // m) * m


def _gelu_exact(x):
    # PyTorch nn.GELU() default (approximate='none') -> exact erf formulation.
    return 0.5 * x * (1.0 + jax.lax.erf(x * _INV_SQRT2))


def _gelu_tanh(x):
    # Optional tanh approximation (routes through EUP); off by default to keep
    # exact PyTorch semantics.
    return 0.5 * x * (1.0 + jnp.tanh(_SQRT_2_OVER_PI * (x + 0.044715 * x * x * x)))


# ---------------------------------------------------------------------------
# One-time, import-time capability probes (kept off the per-call hot path).
# ---------------------------------------------------------------------------
def _probe_buffered():
    if not hasattr(pl, "Buffered"):
        return False
    try:
        pl.BlockSpec((8, 128), lambda i: (0, 0), pipeline_mode=pl.Buffered(1))
        return True
    except Exception:
        return False


def _num_tensorcores():
    # 2 TensorCores per chip only on v7x; v5e/v6e are single-TC.
    try:
        kind = jax.devices()[0].device_kind.lower()
    except Exception:
        return 1
    return 2 if "v7" in kind else 1


def _vmem_capacity_bytes():
    try:
        return int(pltpu.get_tpu_info().vmem_capacity_bytes)
    except Exception:
        return 128 * 1024 * 1024


def _vmem_limit_bytes():
    cap = _vmem_capacity_bytes()
    if cap <= 64 * 1024 * 1024:
        # v7x: 64 MiB physical per TC -> leave headroom for Mosaic scratch.
        return 52 * 1024 * 1024
    return 64 * 1024 * 1024


_HAS_BUFFERED = _probe_buffered()
_NUM_TENSORCORES = _num_tensorcores()


# ---------------------------------------------------------------------------
# Kernel
# ---------------------------------------------------------------------------
def _make_kernel(exact_gelu):
    gelu = _gelu_exact if exact_gelu else _gelu_tanh

    def mlp2_kernel(x_ref, w_ref, b_ref, o_ref):
        """One (row-tile, hidden-tile) block; weight block = [w1 cols | w2 cols]."""
        tn = o_ref.shape[-1]                       # per-branch hidden tile width
        g = gelu(x_ref[...].astype(jnp.float32))   # GELU in f32 (dropout = identity)
        # bf16 MXU matmul for both projections of this hidden tile, f32 accum.
        h = jnp.dot(g.astype(jnp.bfloat16), w_ref[...],
                    preferred_element_type=jnp.float32) + b_ref[...]
        h1 = h[:, :tn]                             # linear1 cols (lane-aligned slice)
        h2 = h[:, tn:]                             # linear2 cols
        o_ref[...] = (h1 * jax.nn.sigmoid(h2)).astype(o_ref.dtype)

    return mlp2_kernel


# ---------------------------------------------------------------------------
# One-time parameter preparation (hoisted out of the forward).
# ---------------------------------------------------------------------------
def _choose_hidden_tile(dim_v, dh_pad, tm_nominal=256):
    """Largest per-branch hidden tile (multiple of 128, divisor of dh_pad) whose
    resident bf16 weight block + f32 GLU intermediate fit in ~half the VMEM cap."""
    budget = _vmem_limit_bytes() // 2
    per_tn = 4 * dim_v + 8 * tm_nominal            # bytes per unit of tn
    tn_cap = max(128, (budget // per_tn) // 128 * 128)
    m = dh_pad // 128
    best = 1
    for k in range(1, m + 1):
        if m % k == 0 and 128 * k <= tn_cap:
            best = k
    return 128 * best


def prepare_mlp2_params(w1, b1, w2, b2, *, hidden_tile=None, tm=256):
    """Fuse/pad/cast weights ONCE.  Returns (wcat, bcat, dim_hidden, hidden_tile).

    Columns of wcat are interleaved per hidden tile h:
      [h*2*tn : h*2*tn+tn]      = w1 columns of tile h
      [h*2*tn+tn : (h+1)*2*tn]  = w2 columns of tile h
    so the grid block (dim_v, 2*tn) at block index h holds matching h1/h2 cols.
    """
    dim_v, dim_hidden = w1.shape
    dh_pad = _round_up(dim_hidden, 128)            # lane-dense per-branch width
    tn = hidden_tile if hidden_tile is not None else _choose_hidden_tile(dim_v, dh_pad, tm)
    assert tn % 128 == 0 and dh_pad % tn == 0
    nh = dh_pad // tn
    pad_c = dh_pad - dim_hidden

    w1p = jnp.pad(w1, ((0, 0), (0, pad_c))).astype(jnp.bfloat16)
    w2p = jnp.pad(w2, ((0, 0), (0, pad_c))).astype(jnp.bfloat16)
    wcat = jnp.stack([w1p.reshape(dim_v, nh, tn),
                      w2p.reshape(dim_v, nh, tn)], axis=2).reshape(dim_v, 2 * dh_pad)

    b1p = jnp.pad(b1, (0, pad_c)).astype(jnp.float32)
    b2p = jnp.pad(b2, (0, pad_c)).astype(jnp.float32)
    bcat = jnp.stack([b1p.reshape(nh, tn),
                      b2p.reshape(nh, tn)], axis=1).reshape(1, 2 * dh_pad)
    return wcat, bcat, dim_hidden, tn


# ---------------------------------------------------------------------------
# Forward (jit-friendly: no blocking, no runtime try/except).
# ---------------------------------------------------------------------------
def mlp2_forward(x, wcat, bcat, *, dim_hidden, hidden_tile, tm=256,
                 out_dtype=None, exact_gelu=True, x_buffers=None):
    """x: [..., dim_v] -> [..., dim_hidden]  (full-glu MLP2, eval mode)."""
    orig_shape = x.shape
    dim_v = orig_shape[-1]
    dh_pad = wcat.shape[1] // 2
    tn = hidden_tile
    num_h = dh_pad // tn
    out_dtype = out_dtype if out_dtype is not None else x.dtype

    x2d = x.reshape(-1, dim_v)
    n = x2d.shape[0]

    # Row tiling: large MXU-friendly tiles; no explicit pad -- partial last
    # block handled by Pallas masked stores and rows are independent.
    tm_eff = _round_up(min(tm, _round_up(n, 16)), 16)
    num_rows = pl.cdiv(n, tm_eff)
    # Split one big tile into two only where megacore sharding can use it (v7x).
    if _NUM_TENSORCORES >= 2 and num_h * num_rows < 2 and tm_eff >= 32:
        tm_eff = _round_up(tm_eff // 2, 16)
        num_rows = pl.cdiv(n, tm_eff)

    # Constant-index weight/bias blocks: single-buffer only when there is a
    # single hidden tile (otherwise keep double buffering to prefetch tile h+1).
    wb_kwargs = {}
    if _HAS_BUFFERED and num_h == 1:
        wb_kwargs = dict(pipeline_mode=pl.Buffered(1))
    x_kwargs = {}
    if _HAS_BUFFERED and x_buffers is not None and x_buffers != 2:
        # Optional knob: Buffered(3) on x if profiling shows exposed activation DMA.
        x_kwargs = dict(pipeline_mode=pl.Buffered(x_buffers))

    out_bytes = jnp.dtype(out_dtype).itemsize
    x_bytes = jnp.dtype(x2d.dtype).itemsize
    flops = 2 * n * dim_v * 2 * dh_pad + 8 * n * dh_pad
    transcendentals = n * dim_v * num_h + n * dh_pad        # erf (per h tile) + sigmoid
    bytes_accessed = (n * dim_v * x_bytes * num_h           # f32 activations (per h tile)
                      + dim_v * 2 * dh_pad * 2              # bf16 fused weight (once)
                      + 2 * dh_pad * 4                      # f32 fused bias
                      + n * dh_pad * out_bytes)             # output

    kernel = _make_kernel(exact_gelu)

    # NOTE: at dim_v < 128 (e.g. the 32-wide test case) the MXU K dimension and
    # the GELU lanes are underfilled; that is a shape property -- batching many
    # such small layers into one call is the only real lever there.
    call = pl.pallas_call(
        kernel,
        out_shape=jax.ShapeDtypeStruct((n, dh_pad), out_dtype),
        grid_spec=pltpu.PrefetchScalarGridSpec(
            num_scalar_prefetch=0,
            # hidden axis OUTER so the weight block index is constant across the
            # inner row axis (weights fetched once per hidden tile).
            grid=(num_h, num_rows),
            in_specs=[
                pl.BlockSpec((tm_eff, dim_v), lambda h, i: (i, 0), **x_kwargs),
                pl.BlockSpec((dim_v, 2 * tn), lambda h, i: (0, h), **wb_kwargs),
                pl.BlockSpec((1, 2 * tn), lambda h, i: (0, h), **wb_kwargs),
            ],
            out_specs=pl.BlockSpec((tm_eff, tn), lambda h, i: (i, h)),
        ),
        compiler_params=pltpu.CompilerParams(
            dimension_semantics=("parallel", "parallel"),
            vmem_limit_bytes=_vmem_limit_bytes(),
        ),
        cost_estimate=pl.CostEstimate(
            flops=flops,
            transcendentals=transcendentals,
            bytes_accessed=bytes_accessed,
        ),
    )

    out = call(x2d, wcat, bcat)
    out = out[:, :dim_hidden]
    return out.reshape(orig_shape[:-1] + (dim_hidden,))


def init_mlp2_params(key, dim_v, dim_hidden, dtype=jnp.float32):
    # Mimic nn.Linear default init: U(-1/sqrt(fan_in), 1/sqrt(fan_in)).
    k1, k2, k3, k4 = jax.random.split(key, 4)
    bound = 1.0 / math.sqrt(dim_v)
    w1 = jax.random.uniform(k1, (dim_v, dim_hidden), dtype, -bound, bound)
    b1 = jax.random.uniform(k2, (dim_hidden,), dtype, -bound, bound)
    w2 = jax.random.uniform(k3, (dim_v, dim_hidden), dtype, -bound, bound)
    b2 = jax.random.uniform(k4, (dim_hidden,), dtype, -bound, bound)
    return w1, b1, w2, b2


if __name__ == "__main__":
    # Small shapes: batch=2, seq=8, dim_v=32, dim_hidden=32.
    batch, seq, dim_v, dim_hidden = 2, 8, 32, 32
    key = jax.random.PRNGKey(0)
    kx, kp = jax.random.split(key)

    x = jax.random.normal(kx, (batch, seq, dim_v), dtype=jnp.float32)
    w1, b1, w2, b2 = init_mlp2_params(kp, dim_v, dim_hidden)

    # One-time parameter preparation (fuse + pad + bf16 cast), then jit the wrapper.
    wcat, bcat, dh, tn = prepare_mlp2_params(w1, b1, w2, b2)
    fwd = jax.jit(lambda xx, wc, bc: mlp2_forward(
        xx, wc, bc, dim_hidden=dh, hidden_tile=tn))

    out = jax.block_until_ready(fwd(x, wcat, bcat))

    # Reference check in plain JAX f32 (same math as the PyTorch module, eval mode).
    g = _gelu_exact(x)
    ref = (g @ w1 + b1) * jax.nn.sigmoid(g @ w2 + b2)
    assert out.shape == (batch, seq, dim_hidden)
    assert jnp.allclose(out, ref, atol=2e-2, rtol=2e-2), \
        float(jnp.max(jnp.abs(out - ref)))

    # TODO(synk): dropout is identity here (rate 0 / eval); training-mode dropout
    # would need pltpu.prng_seed + stateful_bernoulli inside the kernel.
    print("KERNEL_OK")
</pallas_src>

<mosaic_0001>
module attributes {stable_mosaic.version = 11 : i64} {
  func.func @mlp2_kernel(%arg0: i32, %arg1: i32, %arg2: memref<16x32xf32, #tpu.memory_space<vmem>>, %arg3: memref<32x256xbf16, #tpu.memory_space<vmem>>, %arg4: memref<1x256xf32, #tpu.memory_space<vmem>>, %arg5: memref<16x128xf32, #tpu.memory_space<vmem>>) attributes {dimension_semantics = [#tpu.dimension_semantics<parallel>, #tpu.dimension_semantics<parallel>], iteration_bounds = array<i64: 1, 1>, scalar_prefetch = 0 : i64, scratch_operands = 0 : i64, tpu.core_type = #tpu.core_type<tc>, window_params = [{transform_indices = @transform_0, window_bounds = array<i64: 16, 32>}, {pipeline_mode = #tpu.pipeline_mode<synchronous>, transform_indices = @transform_1, window_bounds = array<i64: 32, 256>}, {pipeline_mode = #tpu.pipeline_mode<synchronous>, transform_indices = @transform_2, window_bounds = array<i64: 1, 256>}, {transform_indices = @transform_3, window_bounds = array<i64: 16, 128>}]} {
    %c0 = arith.constant 0 : index
    %c0_0 = arith.constant 0 : index
    %0 = vector.load %arg2[%c0, %c0_0] : memref<16x32xf32, #tpu.memory_space<vmem>>, vector<16x32xf32>
    %cst = arith.constant 5.000000e-01 : f32
    %1 = vector.broadcast %cst : f32 to vector<16x32xf32>
    %2 = arith.mulf %1, %0 : vector<16x32xf32>
    %cst_1 = arith.constant 0.707106769 : f32
    %3 = vector.broadcast %cst_1 : f32 to vector<16x32xf32>
    %4 = arith.mulf %0, %3 : vector<16x32xf32>
    %5 = math.erf %4 : vector<16x32xf32>
    %cst_2 = arith.constant 1.000000e+00 : f32
    %6 = vector.broadcast %cst_2 : f32 to vector<16x32xf32>
    %7 = arith.addf %6, %5 : vector<16x32xf32>
    %8 = arith.mulf %2, %7 : vector<16x32xf32>
    %9 = arith.truncf %8 : vector<16x32xf32> to vector<16x32xbf16>
    %c0_3 = arith.constant 0 : index
    %c0_4 = arith.constant 0 : index
    %10 = vector.load %arg3[%c0_3, %c0_4] : memref<32x256xbf16, #tpu.memory_space<vmem>>, vector<32x256xbf16>
    %cst_5 = arith.constant dense<0.000000e+00> : vector<16x256xf32>
    %11 = tpu.matmul %9, %10, %cst_5 {dimension_numbers = #tpu.dot_dimension_numbers<[1], [0], [0], [1], [0, 0, 1, 1], [], []>} : vector<16x32xbf16>, vector<32x256xbf16>, vector<16x256xf32> -> vector<16x256xf32>
    %c0_6 = arith.constant 0 : index
    %c0_7 = arith.constant 0 : index
    %12 = vector.load %arg4[%c0_6, %c0_7] : memref<1x256xf32, #tpu.memory_space<vmem>>, vector<1x256xf32>
    %13 = vector.broadcast %12 : vector<1x256xf32> to vector<16x256xf32>
    %14 = arith.addf %11, %13 : vector<16x256xf32>
    %15 = vector.extract_strided_slice %14 {offsets = [0, 0], sizes = [16, 128], strides = [1, 1]} : vector<16x256xf32> to vector<16x128xf32>
    %16 = vector.extract_strided_slice %14 {offsets = [0, 128], sizes = [16, 128], strides = [1, 1]} : vector<16x256xf32> to vector<16x128xf32>
    %17 = arith.negf %16 : vector<16x128xf32>
    %18 = math.exp %17 : vector<16x128xf32>
    %cst_8 = arith.constant 1.000000e+00 : f32
    %19 = vector.broadcast %cst_8 : f32 to vector<16x128xf32>
    %20 = arith.addf %19, %18 : vector<16x128xf32>
    %21 = arith.divf %19, %20 : vector<16x128xf32>
    %22 = arith.mulf %15, %21 : vector<16x128xf32>
    %c0_9 = arith.constant 0 : index
    %c0_10 = arith.constant 0 : index
    %23 = vector.load %arg5[%c0_9, %c0_10] : memref<16x128xf32, #tpu.memory_space<vmem>>, vector<16x128xf32>
    tpu.vector_store %arg5[%c0_9, %c0_10], %22 {strides = array<i32>} : memref<16x128xf32, #tpu.memory_space<vmem>>, vector<16x128xf32>,
    return
  }
  func.func @transform_0(%arg0: i32, %arg1: i32) -> (i32, i32) {
    %c0_i32 = arith.constant 0 : i32
    %c0_i32_0 = arith.constant 0 : i32
    return %arg1, %c0_i32 : i32, i32
  }
  func.func @transform_1(%arg0: i32, %arg1: i32) -> (i32, i32) {
    %c0_i32 = arith.constant 0 : i32
    %c0_i32_0 = arith.constant 0 : i32
    return %c0_i32, %arg0 : i32, i32
  }
  func.func @transform_2(%arg0: i32, %arg1: i32) -> (i32, i32) {
    %c0_i32 = arith.constant 0 : i32
    %c0_i32_0 = arith.constant 0 : i32
    return %c0_i32, %arg0 : i32, i32
  }
  func.func @transform_3(%arg0: i32, %arg1: i32) -> (i32, i32) {
    %c0_i32 = arith.constant 0 : i32
    return %arg1, %arg0 : i32, i32
  }
}

</mosaic_0001>

<llo_original>
// kernel: _lambda_.1
$region0: #{_lambda_.1}
  #allocation0 [shape = 'u32[]', space=smem, size = 0x4, offset = 0x4, fixed_abs, tag = 'smem constant byte address 0x4 - core index']
  #allocation1 [shape = 'u32[144,128]{1,0:T(1,128)}', space=vmem, size = 0x12000, scoped, tag = 'internal scratch']
  %s0 = inlined_call_operand.hbm [shape: f32[16,32], index: 0, kind: input, shape index: {}]
  %s1 = inlined_call_operand.hbm [shape: bf16[32,256], index: 1, kind: input, shape index: {}]
  %s2 = inlined_call_operand.hbm [shape: f32[1,256], index: 2, kind: input, shape index: {}]
  %s3 = inlined_call_operand.hbm [shape: f32[16,128], index: 3, kind: output, shape index: {}]
  %s4 = sld [smem:[#allocation0]]
  $region34: #{_lambda_.1} parent=0
    _
  %s6 = ssub.s32 1, %s4
  %s7 = scalar_select 0, %s6, %s4
  $region1: #{_lambda_.1} parent=0
    #allocation2 [shape = 'u8[8192]{0}', space=vmem, size = 0x2000, scoped, tag = 'input window, operand 0, single buffered']
    #allocation3 [shape = 's32[1]{0}', space=sflag, size = 0x4, scoped, tag = 'scoped memory for _lambda_.1']
    #allocation4 [shape = 's32[1]{0}', space=sflag, size = 0x4, scoped, tag = 'scoped memory for _lambda_.1']
    #allocation5 [shape = 'u8[16384]{0}', space=vmem, size = 0x4000, scoped, tag = 'input window, operand 1, single buffered']
    #allocation6 [shape = 's32[1]{0}', space=sflag, size = 0x4, scoped, tag = 'scoped memory for _lambda_.1']
    #allocation7 [shape = 'u8[1024]{0}', space=vmem, size = 0x400, scoped, tag = 'input window, operand 2, single buffered']
    #allocation8 [shape = 'u8[8192]{0}', space=vmem, size = 0x2000, scoped, tag = 'output window, operand 0, single buffered']
    %8 = vsyncpa [#allocation3], 0
    %9 = vsyncpa [#allocation6], 0
    %10 = vsyncpa [#allocation4], 0
    // Predicated region
    $region2: #{_lambda_.1} parent=1 // pred_check
      _
    $region3: #{_lambda_.1} parent=1 // pred_check_branch
      %12 = sbr.rel (0) target = $region5
    $region4: #{_lambda_.1} parent=1 // pred_region
      %s14 = ssub.s32 256, 256
      %15 = vsyncadd [#allocation3], %s14
      %s16 = sshll.u32 [#allocation2], 4
      %s17 = int_to_ptr.vmem [resolvable:$true] %s16
      %22 = dma.hbm_to_vmem [thread:$0]  %s0, 256, %s17, [#allocation3], 128, 128, 8
    $region5: #{_lambda_.1} parent=1 // pred_fallthru
      _
    // Predicated region
    $region6: #{_lambda_.1} parent=1 // pred_check
      _
    $region7: #{_lambda_.1} parent=1 // pred_check_branch
      %24 = sbr.rel (0) target = $region9
    $region8: #{_lambda_.1} parent=1 // pred_region
      %s26 = ssub.s32 512, 512
      %27 = vsyncadd [#allocation6], %s26
      %s28 = sshll.u32 [#allocation5], 4
      %s29 = int_to_ptr.vmem [resolvable:$true] %s28
      %34 = dma.hbm_to_vmem [thread:$0]  %s1, 512, %s29, [#allocation6], 128, 128, 8
    $region9: #{_lambda_.1} parent=1 // pred_fallthru
      _
    // Predicated region
    $region10: #{_lambda_.1} parent=1 // pred_check
      _
    $region11: #{_lambda_.1} parent=1 // pred_check_branch
      %36 = sbr.rel (0) target = $region13
    $region12: #{_lambda_.1} parent=1 // pred_region
      %s38 = ssub.s32 32, 32
      %39 = vsyncadd [#allocation6], %s38
      %s41 = sshll.u32 [#allocation7], 4
      %s42 = int_to_ptr.vmem [resolvable:$true] %s41
      %44 = dma.hbm_to_vmem [thread:$0]  %s2, 32, %s42, [#allocation6]
    $region13: #{_lambda_.1} parent=1 // pred_fallthru
      _
    // Predicated region
    $region14: #{_lambda_.1} parent=1 // pred_check
      _
    $region15: #{_lambda_.1} parent=1 // pred_check_branch
      %46 = sbr.rel (0) target = $region17
    $region16: #{_lambda_.1} parent=1 // pred_region
      %47 = dma.done [#allocation3], 256
    $region17: #{_lambda_.1} parent=1 // pred_fallthru
      _
    // Predicated region
    $region18: #{_lambda_.1} parent=1 // pred_check
      _
    $region19: #{_lambda_.1} parent=1 // pred_check_branch
      %49 = sbr.rel (0) target = $region21
    $region20: #{_lambda_.1} parent=1 // pred_region
      %50 = dma.done [#allocation6], 512
    $region21: #{_lambda_.1} parent=1 // pred_fallthru
      _
    // Predicated region
    $region22: #{_lambda_.1} parent=1 // pred_check
      _
    $region23: #{_lambda_.1} parent=1 // pred_check_branch
      %52 = sbr.rel (0) target = $region25
    $region24: #{_lambda_.1} parent=1 // pred_region
      %53 = dma.done [#allocation6], 32
    $region25: #{_lambda_.1} parent=1 // pred_fallthru
      _
    %v55 = vld [vmem:[#allocation2] sm:$0xff]
    %v56 = vld [vmem:[#allocation2 + $0x8] sm:$0xff]
    %v57 = vmul.f32 %v55, 0.5
    %v58 = vmul.f32 %v56, 0.5
    %v59 = vmul.f32 %v55, 0.70710677
    %v60 = vmul.f32 %v56, 0.70710677
    %v61 = verf.f32.pop %v59
    %v62 = verf.f32.pop %v60
    %v63 = vadd.f32 %v61, 1.0
    %v64 = vadd.f32 %v62, 1.0
    %v65 = vmul.f32 %v57, %v63
    %v66 = vmul.f32 %v58, %v64
    %v67 = vpack.c.bf16 %v66, %v65
    %v68 = vld [vmem:[#allocation5] sm:$0xff]
    %v69 = vld [vmem:[#allocation5 + $0x8] sm:$0xff]
    %v70 = vld [vmem:[#allocation5 + $0x10] sm:$0xff]
    %v71 = vld [vmem:[#allocation5 + $0x18] sm:$0xff]
    %v72 = vld [vmem:[#allocation7] sm:$0x3]
    %v74 = vlaneseq
    %v75 = vshrl.u32 %v74, 7
    %v76 = vsub.s32 0, %v75
    %v77 = vrot.slane %v72, %v76
    %v78 = vlaneseq
    %v79 = vshrl.u32 %v78, 7
    %v80 = vsub.s32 1, %v79
    %v81 = vrot.slane %v72, %v80
    %v88 = vunpack.c.l.b16 %v68
    %v89 = vunpack.c.h.b16 %v68
    %v90 = vunpack.c.l.b16 %v69
    %v91 = vunpack.c.h.b16 %v69
    %v92 = vunpack.c.l.b16 %v70
    %v93 = vunpack.c.h.b16 %v70
    %v94 = vunpack.c.l.b16 %v71
    %v95 = vunpack.c.h.b16 %v71
    %v96 = vpack.c.b16 %v90, %v88
    %v97 = vpack.c.b16 %v91, %v89
    %v98 = vpack.c.b16 %v94, %v92
    %v99 = vpack.c.b16 %v95, %v93
    %vm104 = vcmask 261120
    %v106 = vsel %vm104, %v67, 0
    %108 = vmatprep.subr.bf16.mxu0 %v97
    %109 = vmatpush1.bf16.msra.mxu0 %v96
    %110 = vmatprep.subr.bf16.mxu0 %v99
    %111 = vmatpush1.bf16.msra.mxu0 %v98
    %112 = vmatprep.subr.bf16.mxu0 0
    %113 = vmatpush1.bf16.msra.mxu0 0
    %114 = vmatprep.subr.bf16.mxu0 0
    %115 = vmatpush1.bf16.msra.mxu0 0
    %116 = vmatprep.subr.bf16.mxu0 0
    %117 = vmatpush1.bf16.msra.mxu0 0
    %118 = vmatprep.subr.bf16.mxu0 0
    %119 = vmatpush1.bf16.msra.mxu0 0
    %120 = vmatprep.subr.bf16.mxu0 0
    %121 = vmatpush1.bf16.msra.mxu0 0
    %122 = vmatprep.subr.bf16.mxu0 0
    %123 = vmatpush1.bf16.msra.mxu0 0
    %124 = vmatprep.subr.bf16.mxu0 0
    %125 = vmatpush1.bf16.msra.mxu0 0
    %126 = vmatprep.subr.bf16.mxu0 0
    %127 = vmatpush1.bf16.msra.mxu0 0
    %128 = vmatprep.subr.bf16.mxu0 0
    %129 = vmatpush1.bf16.msra.mxu0 0
    %130 = vmatprep.subr.bf16.mxu0 0
    %131 = vmatpush1.bf16.msra.mxu0 0
    %132 = vmatprep.subr.bf16.mxu0 0
    %133 = vmatpush1.bf16.msra.mxu0 0
    %134 = vmatprep.subr.bf16.mxu0 0
    %135 = vmatpush1.bf16.msra.mxu0 0
    %136 = vmatprep.subr.bf16.mxu0 0
    %137 = vmatpush1.bf16.msra.mxu0 0
    %138 = vmatprep.subr.bf16.mxu0 0
    %139 = vmatpush1.bf16.msra.mxu0 0
    %140 = vmatprep.mubr.bf16.mxu0 0
    %141 = vmatmul.mubr.bf16.gmra.mrb[0].mxu0 %v106
    %v142 = vpop.f32.mrb[0].mxu0
    %v143 = vadd.f32 %v77, %v142
    %v144 = vpop.f32.mrb[0].mxu0
    %v145 = vadd.f32 %v81, %v144
    %v146 = vpop.f32.mrb[0].mxu0
    %v147 = vadd.f32 %v77, %v146
    %v148 = vpop.f32.mrb[0].mxu0
    %v149 = vadd.f32 %v81, %v148
    %150 = vdwg.mxu0
    %v151 = vxor.u32 %v145, 2147483648
    %v152 = vxor.u32 %v149, 2147483648
    %v153 = vmul.f32 %v151, 1.442695
    %v154 = vpow.pop %v153
    %v155 = vmul.f32 %v152, 1.442695
    %v156 = vpow.pop %v155
    %v157 = vadd.f32 %v154, 1.0
    %v158 = vadd.f32 %v156, 1.0
    %v159 = vrcp.pop %v157
    %v160 = vmul.f32 1.0, %v159
    %v161 = vrcp.pop %v158
    %v162 = vmul.f32 1.0, %v161
    %v163 = vmul.f32 %v143, %v160
    %v164 = vmul.f32 %v147, %v162
    %165 = vst [vmem:[#allocation8] sm:$0xff] %v163
    %166 = vst [vmem:[#allocation8 + $0x8] sm:$0xff] %v164
    // Predicated region
    $region26: #{_lambda_.1} parent=1 // pred_check
      _
    $region27: #{_lambda_.1} parent=1 // pred_check_branch
      %168 = sbr.rel (0) target = $region29
    $region28: #{_lambda_.1} parent=1 // pred_region
      %s170 = ssub.s32 256, 256
      %171 = vsyncadd [#allocation4], %s170
      %s172 = sshll.u32 [#allocation8], 4
      %s173 = int_to_ptr.vmem [resolvable:$true] %s172
      %178 = dma.vmem_to_hbm [thread:$0]  %s173, 256, %s3, [#allocation4], 128, 128, 8
    $region29: #{_lambda_.1} parent=1 // pred_fallthru
      _
    // Predicated region
    $region30: #{_lambda_.1} parent=1 // pred_check
      _
    $region31: #{_lambda_.1} parent=1 // pred_check_branch
      %180 = sbr.rel (0) target = $region33
    $region32: #{_lambda_.1} parent=1 // pred_region
      %181 = dma.done [#allocation4], 256
    $region33: #{_lambda_.1} parent=1 // pred_fallthru
      _
    %182 = vsyncpa [#allocation3], 1
    %183 = vsyncpa [#allocation6], 1
    %184 = vsyncpa [#allocation4], 1

</llo_original>
